<compile_context>
chip_gen: v7x
topology: tpu7x:2x2x1
jax: 0.10.0
libtpu: 0.0.40
codegen_flags: <defaults>
</compile_context>

<pallas_src>
import numpy as np
import jax
import jax.numpy as jnp
from jax.experimental import pallas as pl
from jax.experimental.pallas import tpu as pltpu


def _round_up(a, m):
    return (a + m - 1) // m * m


# ---------------------------------------------------------------------------
# Fast path: integer scale factors.
# ---------------------------------------------------------------------------
def _fused_nearest_kernel(x_ref, uw_ref, o_ref):
    # x_ref : (TR, g*W)        lane-folded input rows for this grid step
    # uw_ref: (g*W, g*sh*Ws)   0/1 selection: width upsample + sh row copies
    # o_ref : (TR, g*sh*Ws)    lane-dense output block (unmasked stores)
    # TODO(synk): on v7x the MXU-push cadence (not HBM) may be the cap; a pure
    # data-movement variant (broadcast/roll) could replace the dot there.
    o_ref[...] = jnp.dot(
        x_ref[...].astype(uw_ref.dtype), uw_ref[...],
        preferred_element_type=jnp.float32,
    ).astype(o_ref.dtype)


def _choose_fold(H, W, sh, sw):
    """Pick g | H so folded lane widths are dense (out %256, in %128) and the
    resident one-hot matrix stays small."""
    Ws = W * sw
    best = None
    for g in range(1, H + 1):
        if H % g:
            continue
        gW, gOut = g * W, g * sh * Ws
        if gW * gOut * 4 > 4 * 1024 * 1024 or gOut > 8192:
            continue
        score = ((gOut % 256 == 0), (gOut % 128 == 0), (gW % 128 == 0), -g)
        if best is None or score > best[0]:
            best = (score, g)
    return 1 if best is None else best[1]


def _interpolate_nearest_int(x, sh, sw):
    N, C, H, W = x.shape
    Hs, Ws = H * sh, W * sw

    if not jnp.issubdtype(x.dtype, jnp.floating):
        # TODO(synk): integer dtypes bypass the MXU one-hot path (f32 selection
        # is inexact above 2^24 and v7x has no integer MXU); exact XLA repeat.
        return jnp.repeat(jnp.repeat(x, sh, axis=2), sw, axis=3)

    g = _choose_fold(H, W, sh, sw)
    gW, gOut = g * W, g * sh * Ws
    itemsize = np.dtype(x.dtype).itemsize

    # If even g=1 would need an oversized selection matrix (huge W), use the
    # general path (same selection semantics for integer scales).
    if gW * gOut * itemsize > 4 * 1024 * 1024:
        return _interpolate_nearest_general(x, float(sh), float(sw))

    Rg = (N * C * H) // g
    compute_dtype = x.dtype

    # Fused one-hot: output lane j = ((t*sh + r)*Ws + p), t = folded source row,
    # r = row copy index, p = output width; source lane = t*W + p//sw.
    cols = np.arange(gOut)
    t = cols // (sh * Ws)
    p = cols % Ws
    src = t * W + p // sw
    uw_np = np.zeros((gW, gOut), dtype=np.float32)
    uw_np[src, cols] = 1.0
    uw = jnp.asarray(uw_np, dtype=compute_dtype)

    xf = x.reshape(Rg, gW)

    # --- per-generation VMEM budget with lane-PADDED footprint ---------------
    padded_in = _round_up(gW, 128)
    padded_out = _round_up(gOut, 128)
    bytes_per_row = (padded_in + padded_out) * itemsize

    try:
        vmem_cap = pltpu.get_tpu_info().vmem_capacity_bytes
    except Exception:
        vmem_cap = 128 * 1024 * 1024
    if vmem_cap <= 64 * 1024 * 1024:        # v7x: 64 MiB per TensorCore
        vmem_limit = 48 * 1024 * 1024
        step_target = 10 * 1024 * 1024
    else:                                   # v5e / v6e: 128 MiB
        vmem_limit = 64 * 1024 * 1024
        step_target = 14 * 1024 * 1024

    uw_bytes = gW * gOut * np.dtype(compute_dtype).itemsize
    # double-buffered in/out blocks + (double-buffered) resident one-hot + margin
    data_budget = max(2 * 1024 * 1024,
                      (vmem_limit - 2 * uw_bytes) // 2 - 2 * 1024 * 1024)
    step_bytes = min(step_target, data_budget)
    tr_cap = max(8, (step_bytes // bytes_per_row) // 8 * 8)

    # Never collapse to grid=(1,) when the row count permits: keep >= 2 (ideally
    # 4) steps so megacore (v7x) and the DMA pipeline both have work to split.
    if Rg >= 16:
        steps_target = min(4, Rg // 8)
        tr = min(tr_cap, _round_up(pl.cdiv(Rg, steps_target), 8))
    else:
        tr = min(tr_cap, max(8, _round_up(Rg, 8)))
    grid = (pl.cdiv(Rg, tr),)

    cost = pl.CostEstimate(
        flops=2 * Rg * gW * gOut,
        transcendentals=0,
        bytes_accessed=Rg * (gW + gOut) * itemsize + uw_bytes,
    )

    out = pl.pallas_call(
        _fused_nearest_kernel,
        out_shape=jax.ShapeDtypeStruct((Rg, gOut), x.dtype),
        grid_spec=pltpu.PrefetchScalarGridSpec(
            num_scalar_prefetch=0,
            grid=grid,
            in_specs=[
                pl.BlockSpec((tr, gW), lambda i: (i, 0)),
                pl.BlockSpec((gW, gOut), lambda i: (0, 0)),   # resident constant
            ],
            out_specs=pl.BlockSpec((tr, gOut), lambda i: (i, 0)),
        ),
        compiler_params=pltpu.CompilerParams(
            dimension_semantics=("parallel",),
            vmem_limit_bytes=vmem_limit,
        ),
        cost_estimate=cost,
    )(xf, uw)

    # (Rg, g*sh*Ws) == (N, C, H/g, g, sh, Ws) in memory -> contiguous reshape.
    return out.reshape(N, C, Hs, Ws)


# ---------------------------------------------------------------------------
# Fallback path: arbitrary (non-integer) scale factors — plane-batched.
# ---------------------------------------------------------------------------
def _general_nearest_kernel(x_ref, uh_ref, uw_ref, o_ref):
    # x_ref: (P, H, W) planes; uh: (Hs, H); uw: (W, Ws)
    x = x_ref[...].astype(jnp.float32)
    rows = jnp.einsum('ih,phw->piw', uh_ref[...], x,
                      preferred_element_type=jnp.float32)        # (P, Hs, W)
    out = jnp.einsum('piw,wj->pij', rows, uw_ref[...],
                     preferred_element_type=jnp.float32)         # (P, Hs, Ws)
    o_ref[...] = out.astype(o_ref.dtype)


def _selection_matrix(in_size, out_size):
    # PyTorch 'nearest': src = floor(dst * in_size / out_size), clamped.
    dst = np.arange(out_size)
    src = np.minimum(dst * in_size // out_size, in_size - 1)
    m = np.zeros((out_size, in_size), dtype=np.float32)
    m[dst, src] = 1.0
    return jnp.asarray(m)


def _interpolate_nearest_general(x, sh_f, sw_f):
    N, C, H, W = x.shape
    Hs = int(np.floor(H * sh_f))
    Ws = int(np.floor(W * sw_f))
    NC = N * C

    xf = x.reshape(NC, H, W)
    uh = _selection_matrix(H, Hs)          # (Hs, H)
    uw = _selection_matrix(W, Ws).T        # (W, Ws)

    # Batch P planes per grid step to amortize the ~0.35us per-step overhead.
    itemsize = np.dtype(x.dtype).itemsize
    per_plane = (_round_up(W, 128) * _round_up(H, 8)
                 + _round_up(Ws, 128) * _round_up(Hs, 8)) * max(itemsize, 4)
    P = int(max(1, min(NC, (8 * 1024 * 1024) // max(per_plane, 1))))
    grid = (pl.cdiv(NC, P),)
    # TODO(synk): for very small Ws (<128) output stores are still masked; a
    # lane-fold of planes/width like the integer path would make them dense.

    out = pl.pallas_call(
        _general_nearest_kernel,
        out_shape=jax.ShapeDtypeStruct((NC, Hs, Ws), x.dtype),
        grid_spec=pltpu.PrefetchScalarGridSpec(
            num_scalar_prefetch=0,
            grid=grid,
            in_specs=[
                pl.BlockSpec((P, H, W), lambda i: (i, 0, 0)),
                pl.BlockSpec((Hs, H), lambda i: (0, 0)),
                pl.BlockSpec((W, Ws), lambda i: (0, 0)),
            ],
            out_specs=pl.BlockSpec((P, Hs, Ws), lambda i: (i, 0, 0)),
        ),
        compiler_params=pltpu.CompilerParams(
            dimension_semantics=("parallel",),
            vmem_limit_bytes=64 * 1024 * 1024,
        ),
    )(xf, uh, uw)

    return out.reshape(N, C, Hs, Ws)


# ---------------------------------------------------------------------------
# Dispatcher + module wrapper
# ---------------------------------------------------------------------------
def _as_int_scale(v):
    f = float(v)
    i = int(round(f))
    return i if (f == float(i) and i >= 1) else None


def interpolate_nearest(x, scale_factor):
    """Equivalent of F.interpolate(x, scale_factor=..., mode='nearest'), 4-D NCHW."""
    if isinstance(scale_factor, (tuple, list)):
        sh_raw, sw_raw = scale_factor
    else:
        sh_raw = sw_raw = scale_factor

    sh, sw = _as_int_scale(sh_raw), _as_int_scale(sw_raw)
    if sh is not None and sw is not None:
        return _interpolate_nearest_int(x, sh, sw)
    return _interpolate_nearest_general(x, float(sh_raw), float(sw_raw))


class Interpolate:
    """Mirror of the PyTorch module: Interpolate(scale_factor).forward(x)."""

    def __init__(self, scale_factor):
        self.factor = scale_factor

    def __call__(self, x):
        return interpolate_nearest(x, self.factor)


if __name__ == "__main__":
    key = jax.random.PRNGKey(0)
    x = jax.random.normal(key, (2, 4, 16, 16), dtype=jnp.float32)

    model = Interpolate(scale_factor=2)
    y = jax.block_until_ready(model(x))

    # Reference: nearest-neighbor upsample (what F.interpolate does by default)
    ref = jnp.repeat(jnp.repeat(x, 2, axis=2), 2, axis=3)

    assert y.shape == (2, 4, 32, 32), y.shape
    np.testing.assert_allclose(np.asarray(y), np.asarray(ref), rtol=1e-6, atol=1e-6)
    print("KERNEL_OK")
</pallas_src>

<mosaic_0001>
module attributes {stable_mosaic.version = 11 : i64} {
  func.func @_fused_nearest_kernel(%arg0: i32, %arg1: memref<8x128xf32, #tpu.memory_space<vmem>>, %arg2: memref<128x512xf32, #tpu.memory_space<vmem>>, %arg3: memref<8x512xf32, #tpu.memory_space<vmem>>) attributes {dimension_semantics = [#tpu.dimension_semantics<parallel>], iteration_bounds = array<i64: 2>, scalar_prefetch = 0 : i64, scratch_operands = 0 : i64, tpu.core_type = #tpu.core_type<tc>, window_params = [{transform_indices = @transform_0, window_bounds = array<i64: 8, 128>}, {pipeline_mode = #tpu.pipeline_mode<synchronous>, transform_indices = @transform_1, window_bounds = array<i64: 128, 512>}, {transform_indices = @transform_2, window_bounds = array<i64: 8, 512>}]} {
    %c0 = arith.constant 0 : index
    %c0_0 = arith.constant 0 : index
    %0 = vector.load %arg1[%c0, %c0_0] : memref<8x128xf32, #tpu.memory_space<vmem>>, vector<8x128xf32>
    %c0_1 = arith.constant 0 : index
    %c0_2 = arith.constant 0 : index
    %1 = vector.load %arg2[%c0_1, %c0_2] : memref<128x512xf32, #tpu.memory_space<vmem>>, vector<128x512xf32>
    %cst = arith.constant dense<0.000000e+00> : vector<8x512xf32>
    %2 = tpu.matmul %0, %1, %cst {dimension_numbers = #tpu.dot_dimension_numbers<[1], [0], [0], [1], [0, 0, 1, 1], [], []>} : vector<8x128xf32>, vector<128x512xf32>, vector<8x512xf32> -> vector<8x512xf32>
    %c0_3 = arith.constant 0 : index
    %c0_4 = arith.constant 0 : index
    %3 = vector.load %arg3[%c0_3, %c0_4] : memref<8x512xf32, #tpu.memory_space<vmem>>, vector<8x512xf32>
    tpu.vector_store %arg3[%c0_3, %c0_4], %2 {strides = array<i32>} : memref<8x512xf32, #tpu.memory_space<vmem>>, vector<8x512xf32>,
    return
  }
  func.func @transform_0(%arg0: i32) -> (i32, i32) {
    %c0_i32 = arith.constant 0 : i32
    %c0_i32_0 = arith.constant 0 : i32
    return %arg0, %c0_i32 : i32, i32
  }
  func.func @transform_1(%arg0: i32) -> (i32, i32) {
    %c0_i32 = arith.constant 0 : i32
    %c0_i32_0 = arith.constant 0 : i32
    %c0_i32_1 = arith.constant 0 : i32
    return %c0_i32, %c0_i32_0 : i32, i32
  }
  func.func @transform_2(%arg0: i32) -> (i32, i32) {
    %c0_i32 = arith.constant 0 : i32
    %c0_i32_0 = arith.constant 0 : i32
    return %arg0, %c0_i32 : i32, i32
  }
}

</mosaic_0001>

<llo_original>
// kernel: tpu_custom_call.1
$region0: #{tpu_custom_call.1}
  #allocation0 [shape = 'u32[]', space=smem, size = 0x4, offset = 0x4, fixed_abs, tag = 'smem constant byte address 0x4 - core index']
  #allocation1 [shape = 'u32[144,128]{1,0:T(1,128)}', space=vmem, size = 0x12000, scoped, tag = 'internal scratch']
  %s0 = inlined_call_operand.hbm [shape: f32[16,128], index: 0, kind: input, shape index: {}]
  %s1 = inlined_call_operand.hbm [shape: f32[128,512], index: 1, kind: input, shape index: {}]
  %s2 = inlined_call_operand.hbm [shape: f32[16,512], index: 2, kind: output, shape index: {}]
  %s3 = sld [smem:[#allocation0]]
  $region49: #{tpu_custom_call.1} parent=0
    _
  %s5 = ssub.s32 1, %s3
  %s6 = scalar_select 0, %s5, %s3
  $region1: #{tpu_custom_call.1} parent=0
    #allocation2 [shape = 'u8[8192]{0}', space=vmem, size = 0x2000, scoped, tag = 'input window, operand 0']
    #allocation3 [shape = 's32[2]{0}', space=sflag, size = 0x8, scoped, tag = 'scoped memory for tpu_custom_call.1']
    #allocation4 [shape = 's32[2]{0}', space=sflag, size = 0x8, scoped, tag = 'scoped memory for tpu_custom_call.1']
    #allocation5 [shape = 'u8[262144]{0}', space=vmem, size = 0x40000, scoped, tag = 'input window, operand 1, single buffered']
    #allocation6 [shape = 's32[1]{0}', space=sflag, size = 0x4, scoped, tag = 'scoped memory for tpu_custom_call.1']
    #allocation7 [shape = 'u8[32768]{0}', space=vmem, size = 0x8000, scoped, tag = 'output window, operand 0']
    %7 = vsyncpa [#allocation3], 0
    %s8 = scalar_lea.sflag [#allocation3], 1
    %9 = vsyncpa %s8, 0
    %10 = vsyncpa [#allocation6], 0
    %11 = vsyncpa [#allocation4], 0
    %s12 = scalar_lea.sflag [#allocation4], 1
    %13 = vsyncpa %s12, 0
    loop: start=0, step=1, limit=4
    $region2: #{tpu_custom_call.1} parent=1 // loop_pre_header
      _
    $region3: #{tpu_custom_call.1} parent=1 // loop_header
      %s15 = sphi 0, %s19
      %p16 = scmp.ge.s32.totalorder %s15, 4
      %s25 = sphi 0, %s27
      %s28 = sphi 0, %s25
      %s29 = sphi 0, %s28
      %s45 = sphi 0, %s29
      %s49 = sphi 0, %s49
      %s51 = sphi 0, %s49
      %s52 = sphi 0, %s51
      %s66 = sphi 0, %s52
      %s72 = sphi 0, %s74
      %s75 = sphi 0, %s72
      %s76 = sphi 0, %s75
      %s92 = sphi 0, %s76
    $region4: #{tpu_custom_call.1} parent=1 // loop_header_branch
      %18 = sbr.rel (%p16) target = $region8
    $region5: #{tpu_custom_call.1} parent=1 // loop_body
      %s20 = ssub.s32 %s15, 1
      %s21 = ssub.s32 %s15, 2
      %s22 = sadd.s32 %s15, 1
      %s23 = ssub.s32 %s15, %s22
      %p24 = scmp.eq.s32.totalorder %s23, 0
      %s26 = sadd.s32 %s25, 1
      %s27 = scalar_select %p24, %s25, %s26
      %p30 = pneg %p24
      %p31 = scmp.eq.s32.totalorder %s15, 1
      %p32 = por %p30, %p31
      %p33 = scmp.ne.s32.totalorder %s25, %s28
      %p34 = scmp.eq.s32.totalorder %s15, 0
      %p35 = por %p33, %p34
      %p36 = scmp.ne.s32.totalorder %s25, %s28
      %p37 = scmp.eq.s32.totalorder %s20, 1
      %p38 = por %p36, %p37
      %p39 = scmp.ne.s32.totalorder %s28, %s29
      %p40 = scmp.eq.s32.totalorder %s20, 0
      %p41 = por %p39, %p40
      %p42 = scmp.ne.s32.totalorder %s28, %s29
      %p43 = scmp.eq.s32.totalorder %s21, 1
      %p44 = por %p42, %p43
      %p46 = scmp.ne.s32.totalorder %s29, %s45
      %p47 = scmp.eq.s32.totalorder %s21, 0
      %p48 = por %p46, %p47
      %s50 = sadd.s32 %s49, 1
      %p53 = scmp.eq.s32.totalorder %s15, 1
      %p54 = scmp.ne.s32.totalorder %s49, %s51
      %p55 = scmp.eq.s32.totalorder %s15, 0
      %p56 = por %p54, %p55
      %p57 = scmp.ne.s32.totalorder %s49, %s51
      %p58 = scmp.eq.s32.totalorder %s20, 1
      %p59 = por %p57, %p58
      %p60 = scmp.ne.s32.totalorder %s51, %s52
      %p61 = scmp.eq.s32.totalorder %s20, 0
      %p62 = por %p60, %p61
      %p63 = scmp.ne.s32.totalorder %s51, %s52
      %p64 = scmp.eq.s32.totalorder %s21, 1
      %p65 = por %p63, %p64
      %p67 = scmp.ne.s32.totalorder %s52, %s66
      %p68 = scmp.eq.s32.totalorder %s21, 0
      %p69 = por %p67, %p68
      %s70 = ssub.s32 %s15, %s22
      %p71 = scmp.eq.s32.totalorder %s70, 0
      %s73 = sadd.s32 %s72, 1
      %s74 = scalar_select %p71, %s72, %s73
      %p77 = pneg %p71
      %p78 = scmp.eq.s32.totalorder %s15, 1
      %p79 = por %p77, %p78
      %p80 = scmp.ne.s32.totalorder %s72, %s75
      %p81 = scmp.eq.s32.totalorder %s15, 0
      %p82 = por %p80, %p81
      %p83 = scmp.ne.s32.totalorder %s72, %s75
      %p84 = scmp.eq.s32.totalorder %s20, 1
      %p85 = por %p83, %p84
      %p86 = scmp.ne.s32.totalorder %s75, %s76
      %p87 = scmp.eq.s32.totalorder %s20, 0
      %p88 = por %p86, %p87
      %p89 = scmp.ne.s32.totalorder %s75, %s76
      %p90 = scmp.eq.s32.totalorder %s21, 1
      %p91 = por %p89, %p90
      %p93 = scmp.ne.s32.totalorder %s76, %s92
      %p94 = scmp.eq.s32.totalorder %s21, 0
      %p95 = por %p93, %p94
      %p96 = scmp.le.s32.totalorder 1, %s15
      %p97 = scmp.lt.s32.totalorder %s15, 3
      %p98 = pnand %p96, %p97
      %p99 = pneg %p98
      // Predicated region
      $region9: #{tpu_custom_call.1} parent=5 // pred_check
        _
      $region10: #{tpu_custom_call.1} parent=5 // pred_check_branch
        %101 = sbr.rel (%p98) target = $region12
      $region11: #{tpu_custom_call.1} parent=5 // pred_region
        %s102 = ssub.s32 %s15, 1
        // Predicated region
        $region13: #{tpu_custom_call.1} parent=11 // pred_check
          %p103 = pneg %p62
        $region14: #{tpu_custom_call.1} parent=11 // pred_check_branch
          %105 = sbr.rel (%p103) target = $region16
        $region15: #{tpu_custom_call.1} parent=11 // pred_region
          %s107 = ssub.s32 8192, 8192
          %108 = vsyncadd [#allocation6], %s107
          %s109 = sshll.u32 [#allocation5], 4
          %s110 = int_to_ptr.vmem [resolvable:$true] %s109
          %115 = dma.hbm_to_vmem [thread:$0]  %s1, 8192, %s110, [#allocation6], 512, 512, 32
        $region16: #{tpu_custom_call.1} parent=11 // pred_fallthru
          _
      $region12: #{tpu_custom_call.1} parent=5 // pred_fallthru
        _
      %p116 = scmp.lt.s32.totalorder %s15, 2
      // Predicated region
      $region17: #{tpu_custom_call.1} parent=5 // pred_check
        %p117 = pneg %p116
      $region18: #{tpu_custom_call.1} parent=5 // pred_check_branch
        %119 = sbr.rel (%p117) target = $region20
      $region19: #{tpu_custom_call.1} parent=5 // pred_region
        // Predicated region
        $region21: #{tpu_custom_call.1} parent=19 // pred_check
          %p120 = pneg %p35
        $region22: #{tpu_custom_call.1} parent=19 // pred_check_branch
          %122 = sbr.rel (%p120) target = $region24
        $region23: #{tpu_custom_call.1} parent=19 // pred_region
          %s123 = sand.u32 %s25, 1
          %s124 = scalar_lea.sflag [#allocation3], %s123
          %s125 = sand.u32 %s25, 1
          %s126 = smul.addr %s125, 8
          %s127 = scalar_lea.vmem [#allocation2], %s126
          %s129 = ssub.s32 128, 128
          %130 = vsyncadd %s124, %s129
          %s131 = smul.addr %s15, 128
          %s132 = scalar_lea.hbm %s0, %s131
          %s134 = sshll.u32 %s127, 4
          %s135 = int_to_ptr.vmem [resolvable:$true] %s134
          %137 = dma.hbm_to_vmem [thread:$0]  %s132, 128, %s135, %s124
        $region24: #{tpu_custom_call.1} parent=19 // pred_fallthru
          _
      $region20: #{tpu_custom_call.1} parent=5 // pred_fallthru
        _
      %p138 = scmp.le.s32.totalorder 1, %s15
      %p139 = scmp.lt.s32.totalorder %s15, 3
      %p140 = pnand %p138, %p139
      %p141 = pneg %p140
      // Predicated region
      $region25: #{tpu_custom_call.1} parent=5 // pred_check
        _
      $region26: #{tpu_custom_call.1} parent=5 // pred_check_branch
        %143 = sbr.rel (%p140) target = $region28
      $region27: #{tpu_custom_call.1} parent=5 // pred_region
        %s144 = ssub.s32 %s15, 1
        %s145 = sand.u32 %s28, 1
        %s146 = scalar_lea.sflag [#allocation3], %s145
        %s147 = sand.u32 %s28, 1
        %s148 = smul.addr %s147, 8
        %s149 = scalar_lea.vmem [#allocation2], %s148
        // Predicated region
        $region29: #{tpu_custom_call.1} parent=27 // pred_check
          %p150 = pneg %p41
        $region30: #{tpu_custom_call.1} parent=27 // pred_check_branch
          %152 = sbr.rel (%p150) target = $region32
        $region31: #{tpu_custom_call.1} parent=27 // pred_region
          %153 = dma.done %s146, 128
        $region32: #{tpu_custom_call.1} parent=27 // pred_fallthru
          _
        // Predicated region
        $region33: #{tpu_custom_call.1} parent=27 // pred_check
          %p154 = pneg %p62
        $region34: #{tpu_custom_call.1} parent=27 // pred_check_branch
          %156 = sbr.rel (%p154) target = $region36
        $region35: #{tpu_custom_call.1} parent=27 // pred_region
          %157 = dma.done [#allocation6], 8192
        $region36: #{tpu_custom_call.1} parent=27 // pred_fallthru
          _
        %s158 = sand.u32 %s28, 1
        %s159 = scalar_lea.sflag [#allocation3], %s158
        %s160 = sand.u32 %s28, 1
        %s161 = smul.addr %s160, 8
        %s162 = scalar_lea.vmem [#allocation2], %s161
        %p163 = pneg %p41
        %p164 = pneg %p38
        %p165 = pneg %p62
        %p166 = pneg %p59
        %p167 = pneg %p88
        %p168 = pneg %p85
        %s169 = sand.u32 %s75, 1
        %s170 = scalar_lea.sflag [#allocation4], %s169
        %s171 = sand.u32 %s75, 1
        %s172 = smul.addr %s171, 32
        %s173 = scalar_lea.vmem [#allocation7], %s172
        %v174 = vld [vmem:[%s149] sm:$0xff]
        %v175 = vld [vmem:[#allocation5] sm:$0xff]
        %v176 = vld [vmem:[#allocation5 + $0x8] sm:$0xff]
        %v177 = vld [vmem:[#allocation5 + $0x10] sm:$0xff]
        %v178 = vld [vmem:[#allocation5 + $0x18] sm:$0xff]
        %v179 = vld [vmem:[#allocation5 + $0x20] sm:$0xff]
        %v180 = vld [vmem:[#allocation5 + $0x28] sm:$0xff]
        %v181 = vld [vmem:[#allocation5 + $0x30] sm:$0xff]
        %v182 = vld [vmem:[#allocation5 + $0x38] sm:$0xff]
        %v183 = vld [vmem:[#allocation5 + $0x40] sm:$0xff]
        %v184 = vld [vmem:[#allocation5 + $0x48] sm:$0xff]
        %v185 = vld [vmem:[#allocation5 + $0x50] sm:$0xff]
        %v186 = vld [vmem:[#allocation5 + $0x58] sm:$0xff]
        %v187 = vld [vmem:[#allocation5 + $0x60] sm:$0xff]
        %v188 = vld [vmem:[#allocation5 + $0x68] sm:$0xff]
        %v189 = vld [vmem:[#allocation5 + $0x70] sm:$0xff]
        %v190 = vld [vmem:[#allocation5 + $0x78] sm:$0xff]
        %v191 = vld [vmem:[#allocation5 + $0x80] sm:$0xff]
        %v192 = vld [vmem:[#allocation5 + $0x88] sm:$0xff]
        %v193 = vld [vmem:[#allocation5 + $0x90] sm:$0xff]
        %v194 = vld [vmem:[#allocation5 + $0x98] sm:$0xff]
        %v195 = vld [vmem:[#allocation5 + $0xa0] sm:$0xff]
        %v196 = vld [vmem:[#allocation5 + $0xa8] sm:$0xff]
        %v197 = vld [vmem:[#allocation5 + $0xb0] sm:$0xff]
        %v198 = vld [vmem:[#allocation5 + $0xb8] sm:$0xff]
        %v199 = vld [vmem:[#allocation5 + $0xc0] sm:$0xff]
        %v200 = vld [vmem:[#allocation5 + $0xc8] sm:$0xff]
        %v201 = vld [vmem:[#allocation5 + $0xd0] sm:$0xff]
        %v202 = vld [vmem:[#allocation5 + $0xd8] sm:$0xff]
        %v203 = vld [vmem:[#allocation5 + $0xe0] sm:$0xff]
        %v204 = vld [vmem:[#allocation5 + $0xe8] sm:$0xff]
        %v205 = vld [vmem:[#allocation5 + $0xf0] sm:$0xff]
        %v206 = vld [vmem:[#allocation5 + $0xf8] sm:$0xff]
        %v207 = vld [vmem:[#allocation5 + $0x100] sm:$0xff]
        %v208 = vld [vmem:[#allocation5 + $0x108] sm:$0xff]
        %v209 = vld [vmem:[#allocation5 + $0x110] sm:$0xff]
        %v210 = vld [vmem:[#allocation5 + $0x118] sm:$0xff]
        %v211 = vld [vmem:[#allocation5 + $0x120] sm:$0xff]
        %v212 = vld [vmem:[#allocation5 + $0x128] sm:$0xff]
        %v213 = vld [vmem:[#allocation5 + $0x130] sm:$0xff]
        %v214 = vld [vmem:[#allocation5 + $0x138] sm:$0xff]
        %v215 = vld [vmem:[#allocation5 + $0x140] sm:$0xff]
        %v216 = vld [vmem:[#allocation5 + $0x148] sm:$0xff]
        %v217 = vld [vmem:[#allocation5 + $0x150] sm:$0xff]
        %v218 = vld [vmem:[#allocation5 + $0x158] sm:$0xff]
        %v219 = vld [vmem:[#allocation5 + $0x160] sm:$0xff]
        %v220 = vld [vmem:[#allocation5 + $0x168] sm:$0xff]
        %v221 = vld [vmem:[#allocation5 + $0x170] sm:$0xff]
        %v222 = vld [vmem:[#allocation5 + $0x178] sm:$0xff]
        %v223 = vld [vmem:[#allocation5 + $0x180] sm:$0xff]
        %v224 = vld [vmem:[#allocation5 + $0x188] sm:$0xff]
        %v225 = vld [vmem:[#allocation5 + $0x190] sm:$0xff]
        %v226 = vld [vmem:[#allocation5 + $0x198] sm:$0xff]
        %v227 = vld [vmem:[#allocation5 + $0x1a0] sm:$0xff]
        %v228 = vld [vmem:[#allocation5 + $0x1a8] sm:$0xff]
        %v229 = vld [vmem:[#allocation5 + $0x1b0] sm:$0xff]
        %v230 = vld [vmem:[#allocation5 + $0x1b8] sm:$0xff]
        %v231 = vld [vmem:[#allocation5 + $0x1c0] sm:$0xff]
        %v232 = vld [vmem:[#allocation5 + $0x1c8] sm:$0xff]
        %v233 = vld [vmem:[#allocation5 + $0x1d0] sm:$0xff]
        %v234 = vld [vmem:[#allocation5 + $0x1d8] sm:$0xff]
        %v235 = vld [vmem:[#allocation5 + $0x1e0] sm:$0xff]
        %v236 = vld [vmem:[#allocation5 + $0x1e8] sm:$0xff]
        %v237 = vld [vmem:[#allocation5 + $0x1f0] sm:$0xff]
        %v238 = vld [vmem:[#allocation5 + $0x1f8] sm:$0xff]
        %239 = vmatprep.subr.mxu0 %v176
        %240 = vmatpush1.msra.mxu0 %v175
        %241 = vmatprep.subr.mxu0 %v180
        %242 = vmatpush1.msra.mxu0 %v179
        %243 = vmatprep.subr.mxu0 %v184
        %244 = vmatpush1.msra.mxu0 %v183
        %245 = vmatprep.subr.mxu0 %v188
        %246 = vmatpush1.msra.mxu0 %v187
        %247 = vmatprep.subr.mxu0 %v192
        %248 = vmatpush1.msra.mxu0 %v191
        %249 = vmatprep.subr.mxu0 %v196
        %250 = vmatpush1.msra.mxu0 %v195
        %251 = vmatprep.subr.mxu0 %v200
        %252 = vmatpush1.msra.mxu0 %v199
        %253 = vmatprep.subr.mxu0 %v204
        %254 = vmatpush1.msra.mxu0 %v203
        %255 = vmatprep.subr.mxu0 %v208
        %256 = vmatpush1.msra.mxu0 %v207
        %257 = vmatprep.subr.mxu0 %v212
        %258 = vmatpush1.msra.mxu0 %v211
        %259 = vmatprep.subr.mxu0 %v216
        %260 = vmatpush1.msra.mxu0 %v215
        %261 = vmatprep.subr.mxu0 %v220
        %262 = vmatpush1.msra.mxu0 %v219
        %263 = vmatprep.subr.mxu0 %v224
        %264 = vmatpush1.msra.mxu0 %v223
        %265 = vmatprep.subr.mxu0 %v228
        %266 = vmatpush1.msra.mxu0 %v227
        %267 = vmatprep.subr.mxu0 %v232
        %268 = vmatpush1.msra.mxu0 %v231
        %269 = vmatprep.subr.mxu0 %v236
        %270 = vmatpush1.msra.mxu0 %v235
        %271 = vmatprep.subr.mxu0 0.0
        %272 = vmatpush1.msra.mxu0 0.0
        %273 = vmatprep.subr.mxu0 0.0
        %274 = vmatpush1.msra.mxu0 0.0
        %275 = vmatprep.subr.mxu0 0.0
        %276 = vmatpush1.msra.mxu0 0.0
        %277 = vmatprep.subr.mxu0 0.0
        %278 = vmatpush1.msra.mxu0 0.0
        %279 = vmatprep.subr.mxu0 0.0
        %280 = vmatpush1.msra.mxu0 0.0
        %281 = vmatprep.subr.mxu0 0.0
        %282 = vmatpush1.msra.mxu0 0.0
        %283 = vmatprep.subr.mxu0 0.0
        %284 = vmatpush1.msra.mxu0 0.0
        %285 = vmatprep.subr.mxu0 0.0
        %286 = vmatpush1.msra.mxu0 0.0
        %287 = vmatprep.subr.mxu0 0.0
        %288 = vmatpush1.msra.mxu0 0.0
        %289 = vmatprep.subr.mxu0 0.0
        %290 = vmatpush1.msra.mxu0 0.0
        %291 = vmatprep.subr.mxu0 0.0
        %292 = vmatpush1.msra.mxu0 0.0
        %293 = vmatprep.subr.mxu0 0.0
        %294 = vmatpush1.msra.mxu0 0.0
        %295 = vmatprep.subr.mxu0 0.0
        %296 = vmatpush1.msra.mxu0 0.0
        %297 = vmatprep.subr.mxu0 0.0
        %298 = vmatpush1.msra.mxu0 0.0
        %299 = vmatprep.subr.mxu0 0.0
        %300 = vmatpush1.msra.mxu0 0.0
        %301 = vmatprep.subr.mxu0 0.0
        %302 = vmatpush1.msra.mxu0 0.0
        %303 = vmatprep.mubr.f32.mxu0 0.0
        %304 = vmatmul.mubr.f32.gmra.mrb[0].mxu0 %v174
        %v305 = vpop.f32.mrb[0].mxu0
        %v306 = vadd.f32 0.0, %v305
        %v307 = vpop.f32.mrb[0].mxu0
        %v308 = vadd.f32 0.0, %v307
        %309 = vdwg.mxu0
        %310 = vmatprep.subr.mxu0 %v178
        %311 = vmatpush1.msra.mxu0 %v177
        %312 = vmatprep.subr.mxu0 %v182
        %313 = vmatpush1.msra.mxu0 %v181
        %314 = vmatprep.subr.mxu0 %v186
        %315 = vmatpush1.msra.mxu0 %v185
        %316 = vmatprep.subr.mxu0 %v190
        %317 = vmatpush1.msra.mxu0 %v189
        %318 = vmatprep.subr.mxu0 %v194
        %319 = vmatpush1.msra.mxu0 %v193
        %320 = vmatprep.subr.mxu0 %v198
        %321 = vmatpush1.msra.mxu0 %v197
        %322 = vmatprep.subr.mxu0 %v202
        %323 = vmatpush1.msra.mxu0 %v201
        %324 = vmatprep.subr.mxu0 %v206
        %325 = vmatpush1.msra.mxu0 %v205
        %326 = vmatprep.subr.mxu0 %v210
        %327 = vmatpush1.msra.mxu0 %v209
        %328 = vmatprep.subr.mxu0 %v214
        %329 = vmatpush1.msra.mxu0 %v213
        %330 = vmatprep.subr.mxu0 %v218
        %331 = vmatpush1.msra.mxu0 %v217
        %332 = vmatprep.subr.mxu0 %v222
        %333 = vmatpush1.msra.mxu0 %v221
        %334 = vmatprep.subr.mxu0 %v226
        %335 = vmatpush1.msra.mxu0 %v225
        %336 = vmatprep.subr.mxu0 %v230
        %337 = vmatpush1.msra.mxu0 %v229
        %338 = vmatprep.subr.mxu0 %v234
        %339 = vmatpush1.msra.mxu0 %v233
        %340 = vmatprep.subr.mxu0 %v238
        %341 = vmatpush1.msra.mxu0 %v237
        %342 = vmatprep.subr.mxu0 0.0
        %343 = vmatpush1.msra.mxu0 0.0
        %344 = vmatprep.subr.mxu0 0.0
        %345 = vmatpush1.msra.mxu0 0.0
        %346 = vmatprep.subr.mxu0 0.0
        %347 = vmatpush1.msra.mxu0 0.0
        %348 = vmatprep.subr.mxu0 0.0
        %349 = vmatpush1.msra.mxu0 0.0
        %350 = vmatprep.subr.mxu0 0.0
        %351 = vmatpush1.msra.mxu0 0.0
        %352 = vmatprep.subr.mxu0 0.0
        %353 = vmatpush1.msra.mxu0 0.0
        %354 = vmatprep.subr.mxu0 0.0
        %355 = vmatpush1.msra.mxu0 0.0
        %356 = vmatprep.subr.mxu0 0.0
        %357 = vmatpush1.msra.mxu0 0.0
        %358 = vmatprep.subr.mxu0 0.0
        %359 = vmatpush1.msra.mxu0 0.0
        %360 = vmatprep.subr.mxu0 0.0
        %361 = vmatpush1.msra.mxu0 0.0
        %362 = vmatprep.subr.mxu0 0.0
        %363 = vmatpush1.msra.mxu0 0.0
        %364 = vmatprep.subr.mxu0 0.0
        %365 = vmatpush1.msra.mxu0 0.0
        %366 = vmatprep.subr.mxu0 0.0
        %367 = vmatpush1.msra.mxu0 0.0
        %368 = vmatprep.subr.mxu0 0.0
        %369 = vmatpush1.msra.mxu0 0.0
        %370 = vmatprep.subr.mxu0 0.0
        %371 = vmatpush1.msra.mxu0 0.0
        %372 = vmatprep.subr.mxu0 0.0
        %373 = vmatpush1.msra.mxu0 0.0
        %374 = vmatprep.mubr.f32.mxu0 0.0
        %375 = vmatmul.mubr.f32.gmra.mrb[0].mxu0 %v174
        %v376 = vpop.f32.mrb[0].mxu0
        %v377 = vadd.f32 0.0, %v376
        %v378 = vpop.f32.mrb[0].mxu0
        %v379 = vadd.f32 0.0, %v378
        %380 = vdwg.mxu0
        %381 = vst [vmem:[%s173] sm:$0xff] %v306
        %382 = vst [vmem:[%s173 + $0x8] sm:$0xff] %v308
        %383 = vst [vmem:[%s173 + $0x10] sm:$0xff] %v377
        %384 = vst [vmem:[%s173 + $0x18] sm:$0xff] %v379
        %s385 = sand.u32 %s75, 1
        %s386 = scalar_lea.sflag [#allocation4], %s385
        %s387 = sand.u32 %s75, 1
        %s388 = smul.addr %s387, 32
        %s389 = scalar_lea.vmem [#allocation7], %s388
        // Predicated region
        $region37: #{tpu_custom_call.1} parent=27 // pred_check
          %p390 = pneg %p85
        $region38: #{tpu_custom_call.1} parent=27 // pred_check_branch
          %392 = sbr.rel (%p390) target = $region40
        $region39: #{tpu_custom_call.1} parent=27 // pred_region
          %s394 = ssub.s32 512, 512
          %395 = vsyncadd %s386, %s394
          %s396 = smul.addr %s20, 4
          %s397 = smul.addr %s396, 128
          %s398 = scalar_lea.hbm %s2, %s397
          %s400 = sshll.u32 %s389, 4
          %s401 = int_to_ptr.vmem [resolvable:$true] %s400
          %403 = dma.vmem_to_hbm [thread:$0]  %s401, 512, %s398, %s386
        $region40: #{tpu_custom_call.1} parent=27 // pred_fallthru
          _
      $region28: #{tpu_custom_call.1} parent=5 // pred_fallthru
        _
      %p404 = scmp.le.s32.totalorder 2, %s15
      // Predicated region
      $region41: #{tpu_custom_call.1} parent=5 // pred_check
        %p405 = pneg %p404
      $region42: #{tpu_custom_call.1} parent=5 // pred_check_branch
        %407 = sbr.rel (%p405) target = $region44
      $region43: #{tpu_custom_call.1} parent=5 // pred_region
        %s408 = ssub.s32 %s15, 2
        // Predicated region
        $region45: #{tpu_custom_call.1} parent=43 // pred_check
          %p409 = pneg %p91
        $region46: #{tpu_custom_call.1} parent=43 // pred_check_branch
          %411 = sbr.rel (%p409) target = $region48
        $region47: #{tpu_custom_call.1} parent=43 // pred_region
          %s412 = sand.u32 %s76, 1
          %s413 = scalar_lea.sflag [#allocation4], %s412
          %s414 = sand.u32 %s76, 1
          %s415 = smul.addr %s414, 32
          %s416 = scalar_lea.vmem [#allocation7], %s415
          %417 = dma.done %s413, 512
        $region48: #{tpu_custom_call.1} parent=43 // pred_fallthru
          _
      $region44: #{tpu_custom_call.1} parent=5 // pred_fallthru
        _
    $region6: #{tpu_custom_call.1} parent=1 // loop_footer
      %s19 = sadd.s32 1, %s15
    $region7: #{tpu_custom_call.1} parent=1 // loop_footer_branch
      %14 = sbr.rel target = $region3
    $region8: #{tpu_custom_call.1} parent=1 // loop_exit
      _
    %418 = vsyncpa [#allocation3], 1
    %s419 = scalar_lea.sflag [#allocation3], 1
    %420 = vsyncpa %s419, 1
    %421 = vsyncpa [#allocation6], 1
    %422 = vsyncpa [#allocation4], 1
    %s423 = scalar_lea.sflag [#allocation4], 1
    %424 = vsyncpa %s423, 1

</llo_original>
